<compile_context>
chip_gen: v7x
topology: tpu7x:2x2x1
jax: 0.10.0
libtpu: 0.0.40
codegen_flags: <defaults>
</compile_context>

<pallas_src>
import jax
import jax.numpy as jnp
from jax.experimental import pallas as pl
from jax.experimental.pallas import tpu as pltpu

_LANES = 128
_MAX_BLOCK_ROWS = 8192        # f32: 4 MiB/input tile; 2 inputs x 2 buffers = 16 MiB
_CHUNK_ROWS = 1024            # rows per inner accumulation step (bounds temporaries)
_NUM_SPLITS = 2               # one split per TensorCore on v7x; harmless elsewhere
_VMEM_LIMIT_BYTES = 32 * 1024 * 1024


def _round_down(x, m):
    return (x // m) * m


def _sublane_gran(dtype):
    """Minimum row (sublane) granularity for a dtype's packed tiling."""
    itemsize = jnp.dtype(dtype).itemsize
    return 8 * max(1, 4 // itemsize)      # f32 -> 8, bf16/f16 -> 16, int8 -> 32


def _make_dice_kernel(rows_valid, block_rows, blocks_per_split, n_blocks,
                      chunk_bounds, need_mask):
    """Accumulates per-split partial sums into a (1, 2, 8, 128) f32 output block.

    Slot 0: sum of sigmoid(l) * t   (intersection)
    Slot 1: sum of sigmoid(l) + t   (denominator m1.sum() + m2.sum())
    """

    def _accumulate(l_ref, t_ref, out_ref, blk, masked):
        acc_i = jnp.zeros((8, _LANES), jnp.float32)
        acc_d = jnp.zeros((8, _LANES), jnp.float32)
        for r0, size in chunk_bounds:               # static, fully unrolled
            logits = l_ref[pl.ds(r0, size), :].astype(jnp.float32)
            targets = t_ref[pl.ds(r0, size), :].astype(jnp.float32)
            # Single-transcendental sigmoid (EUP tanh); identical to 1/(1+exp(-x)).
            probs = 0.5 * jnp.tanh(0.5 * logits) + 0.5
            if masked:
                # Compare global row index only (stays well inside int32 range).
                row = jax.lax.broadcasted_iota(jnp.int32, (size, _LANES), 0)
                valid = (blk * block_rows + r0) + row < rows_valid
                probs = jnp.where(valid, probs, 0.0)
                targets = jnp.where(valid, targets, 0.0)
            inter = probs * targets
            denom = probs + targets
            # (size, 128) -> (8, 128): layout-preserving reshape + pure VPU adds.
            acc_i = acc_i + jnp.sum(inter.reshape(size // 8, 8, _LANES), axis=0)
            acc_d = acc_d + jnp.sum(denom.reshape(size // 8, 8, _LANES), axis=0)
        out_ref[0, 0] = out_ref[0, 0] + acc_i
        out_ref[0, 1] = out_ref[0, 1] + acc_d

    def kernel(l_ref, t_ref, out_ref):
        j = pl.program_id(1)

        @pl.when(j == 0)
        def _init():
            out_ref[...] = jnp.zeros_like(out_ref)

        if need_mask:
            blk = pl.program_id(0) * blocks_per_split + j
            # Only the last real block (tail overhang / tiny-pad rows) and phantom
            # blocks (uneven split) need masking; interior blocks are fully valid.
            is_edge = blk >= (n_blocks - 1)

            @pl.when(jnp.logical_not(is_edge))
            def _fast():
                _accumulate(l_ref, t_ref, out_ref, blk, masked=False)

            @pl.when(is_edge)
            def _edge():
                _accumulate(l_ref, t_ref, out_ref, blk, masked=True)
        else:
            _accumulate(l_ref, t_ref, out_ref, 0, masked=False)

    return kernel


@jax.jit
def dice_loss(logits, targets):
    """Pallas implementation of Dice_loss.forward (returns a scalar f32)."""
    assert logits.shape == targets.shape, (logits.shape, targets.shape)
    n = logits.size                       # static Python int (shapes are static)
    smooth = jnp.float32(1.0)

    flat_l = logits.reshape(-1)
    flat_t = targets.reshape(-1)
    # Keep targets narrow in HBM (bool -> int8 is byte-wide); upcast to f32 in-kernel.
    if flat_t.dtype == jnp.bool_:
        flat_t = flat_t.astype(jnp.int8)

    rows = n // _LANES
    n_main = rows * _LANES

    # Ragged (< 128 element) remainder handled in the plain-JAX epilogue instead of
    # padding both full arrays in HBM.
    if n_main < n:
        rem_p = jax.nn.sigmoid(flat_l[n_main:].astype(jnp.float32))
        rem_t = flat_t[n_main:].astype(jnp.float32)
        rem_inter = jnp.sum(rem_p * rem_t)
        rem_denom = jnp.sum(rem_p) + jnp.sum(rem_t)
        main_l, main_t = flat_l[:n_main], flat_t[:n_main]
    else:
        rem_inter = jnp.float32(0.0)
        rem_denom = jnp.float32(0.0)
        main_l, main_t = flat_l, flat_t

    if rows == 0:
        # Entire input is smaller than one 128-lane row: nothing for the kernel.
        score = 2.0 * (rem_inter + smooth) / (rem_denom + smooth)
        return jnp.float32(1.0) - score

    # View as (rows, 128) so the last dim maps to the 128-lane vreg axis (free for
    # contiguous inputs).
    l2d = main_l.reshape(rows, _LANES)
    t2d = main_t.reshape(rows, _LANES)

    gran = max(_sublane_gran(l2d.dtype), _sublane_gran(t2d.dtype))
    rows_valid = rows
    if rows < gran:
        # Tiny input: pad a handful of rows (< 4 KiB) so a single legal block covers
        # it; padded rows are excluded via the in-kernel mask.
        l2d = jnp.pad(l2d, ((0, gran - rows), (0, 0)))
        t2d = jnp.pad(t2d, ((0, gran - rows), (0, 0)))
        rows = gran

    block_rows = min(_MAX_BLOCK_ROWS, _round_down(rows, gran))
    n_blocks = pl.cdiv(rows, block_rows)
    n_splits = min(_NUM_SPLITS, n_blocks)
    blocks_per_split = pl.cdiv(n_blocks, n_splits)
    need_mask = (n_splits * blocks_per_split * block_rows) != rows_valid

    # Static chunk schedule inside a block (bounds full-tile f32 temporaries).
    chunk_bounds = []
    r = 0
    while r < block_rows:
        size = min(_CHUNK_ROWS, block_rows - r)
        chunk_bounds.append((r, size))
        r += size

    kernel = _make_dice_kernel(rows_valid, block_rows, blocks_per_split,
                               n_blocks, tuple(chunk_bounds), need_mask)

    def in_map(s, j):
        # Clamp phantom block indices (uneven split) into range; their data is fully
        # masked inside the kernel, so re-reading the last block is safe.
        return (jnp.minimum(s * blocks_per_split + j, n_blocks - 1), 0)

    partials = pl.pallas_call(
        kernel,
        out_shape=jax.ShapeDtypeStruct((n_splits, 2, 8, _LANES), jnp.float32),
        grid=(n_splits, blocks_per_split),
        in_specs=[
            pl.BlockSpec((block_rows, _LANES), in_map),
            pl.BlockSpec((block_rows, _LANES), in_map),
        ],
        out_specs=pl.BlockSpec((1, 2, 8, _LANES), lambda s, j: (s, 0, 0, 0)),
        compiler_params=pltpu.CompilerParams(
            dimension_semantics=("parallel", "arbitrary"),
            vmem_limit_bytes=_VMEM_LIMIT_BYTES),
    )(l2d, t2d)

    # Tiny epilogue (n_splits * 2 * 8 * 128 floats) in plain JAX.
    sums = jnp.sum(partials, axis=(0, 2, 3))          # [intersection, m1 + m2]
    inter = sums[0] + rem_inter
    denom = sums[1] + rem_denom
    score = 2.0 * (inter + smooth) / (denom + smooth)
    return jnp.float32(1.0) - score


def _dice_loss_ref(logits, targets):
    """Pure-JAX reference mirroring the PyTorch forward."""
    smooth = 1.0
    m1 = jax.nn.sigmoid(logits.astype(jnp.float32)).reshape(-1)
    m2 = targets.reshape(-1).astype(jnp.float32)
    inter = jnp.sum(m1 * m2)
    score = 2.0 * (inter + smooth) / (jnp.sum(m1) + jnp.sum(m2) + smooth)
    return 1.0 - score


if __name__ == "__main__":
    key = jax.random.PRNGKey(0)
    k1, k2, k3, k4 = jax.random.split(key, 4)

    # Segmentation-style NCHW inputs (lane-aligned, float targets).
    logits = jax.random.normal(k1, (2, 4, 16, 16), dtype=jnp.float32)
    targets = (jax.random.uniform(k2, (2, 4, 16, 16)) > 0.5).astype(jnp.float32)
    loss = jax.block_until_ready(dice_loss(logits, targets))
    ref = _dice_loss_ref(logits, targets)
    assert jnp.allclose(loss, ref, rtol=1e-5, atol=1e-5), (loss, ref)

    # Non-lane-aligned shape with boolean targets: exercises the masked edge path,
    # the narrow int8 target stream and the ragged-remainder epilogue.
    logits2 = jax.random.normal(k3, (2, 3, 7, 11), dtype=jnp.float32)
    targets2 = jax.random.uniform(k4, (2, 3, 7, 11)) > 0.5
    loss2 = jax.block_until_ready(dice_loss(logits2, targets2))
    ref2 = _dice_loss_ref(logits2, targets2)
    assert jnp.allclose(loss2, ref2, rtol=1e-5, atol=1e-5), (loss2, ref2)

    print("KERNEL_OK")
</pallas_src>

<mosaic_0001>
module attributes {stable_mosaic.version = 11 : i64} {
  func.func @kernel(%arg0: i32, %arg1: i32, %arg2: memref<16x128xf32, #tpu.memory_space<vmem>>, %arg3: memref<16x128xf32, #tpu.memory_space<vmem>>, %arg4: memref<1x2x8x128xf32, #tpu.memory_space<vmem>>) attributes {dimension_semantics = [#tpu.dimension_semantics<parallel>, #tpu.dimension_semantics<arbitrary>], iteration_bounds = array<i64: 1, 1>, scalar_prefetch = 0 : i64, scratch_operands = 0 : i64, tpu.core_type = #tpu.core_type<tc>, window_params = [{transform_indices = @transform_0, window_bounds = array<i64: 16, 128>}, {transform_indices = @transform_1, window_bounds = array<i64: 16, 128>}, {transform_indices = @transform_2, window_bounds = array<i64: 1, 2, 8, 128>}]} {
    %c0_i32 = arith.constant 0 : i32
    %0 = arith.cmpi eq, %arg1, %c0_i32 : i32
    %1 = arith.extui %0 : i1 to i32
    %c0_i32_0 = arith.constant 0 : i32
    %2 = arith.cmpi ne, %1, %c0_i32_0 : i32
    scf.if %2 {
      %cst_25 = arith.constant 0.000000e+00 : f32
      %34 = vector.broadcast %cst_25 : f32 to vector<1x2x8x128xf32>
      %c0_26 = arith.constant 0 : index
      %c0_27 = arith.constant 0 : index
      %c0_28 = arith.constant 0 : index
      %c0_29 = arith.constant 0 : index
      %35 = vector.load %arg4[%c0_26, %c0_27, %c0_28, %c0_29] : memref<1x2x8x128xf32, #tpu.memory_space<vmem>>, vector<1x2x8x128xf32>
      tpu.vector_store %arg4[%c0_26, %c0_27, %c0_28, %c0_29], %34 {strides = array<i32>} : memref<1x2x8x128xf32, #tpu.memory_space<vmem>>, vector<1x2x8x128xf32>,
    } else {
    }
    %cst = arith.constant 0.000000e+00 : f32
    %3 = vector.broadcast %cst : f32 to vector<8x128xf32>
    %cst_1 = arith.constant 0.000000e+00 : f32
    %4 = vector.broadcast %cst_1 : f32 to vector<8x128xf32>
    %c0 = arith.constant 0 : index
    %c0_2 = arith.constant 0 : index
    %5 = vector.load %arg2[%c0, %c0_2] : memref<16x128xf32, #tpu.memory_space<vmem>>, vector<16x128xf32>
    %c0_3 = arith.constant 0 : index
    %c0_4 = arith.constant 0 : index
    %6 = vector.load %arg3[%c0_3, %c0_4] : memref<16x128xf32, #tpu.memory_space<vmem>>, vector<16x128xf32>
    %cst_5 = arith.constant 5.000000e-01 : f32
    %7 = vector.broadcast %cst_5 : f32 to vector<16x128xf32>
    %8 = arith.mulf %7, %5 : vector<16x128xf32>
    %9 = math.tanh %8 : vector<16x128xf32>
    %cst_6 = arith.constant 5.000000e-01 : f32
    %10 = vector.broadcast %cst_6 : f32 to vector<16x128xf32>
    %11 = arith.mulf %10, %9 : vector<16x128xf32>
    %cst_7 = arith.constant 5.000000e-01 : f32
    %12 = vector.broadcast %cst_7 : f32 to vector<16x128xf32>
    %13 = arith.addf %11, %12 : vector<16x128xf32>
    %14 = arith.mulf %13, %6 : vector<16x128xf32>
    %15 = arith.addf %13, %6 : vector<16x128xf32>
    %16 = vector.shape_cast %14 : vector<16x128xf32> to vector<2x8x128xf32>
    %cst_8 = arith.constant dense<0.000000e+00> : vector<8x128xf32>
    %17 = vector.multi_reduction <add>, %16, %cst_8 [0] : vector<2x8x128xf32> to vector<8x128xf32>
    %18 = arith.addf %3, %17 : vector<8x128xf32>
    %19 = vector.shape_cast %15 : vector<16x128xf32> to vector<2x8x128xf32>
    %cst_9 = arith.constant dense<0.000000e+00> : vector<8x128xf32>
    %20 = vector.multi_reduction <add>, %19, %cst_9 [0] : vector<2x8x128xf32> to vector<8x128xf32>
    %21 = arith.addf %4, %20 : vector<8x128xf32>
    %c0_10 = arith.constant 0 : index
    %c0_11 = arith.constant 0 : index
    %c0_12 = arith.constant 0 : index
    %c0_13 = arith.constant 0 : index
    %22 = vector.load %arg4[%c0_10, %c0_11, %c0_12, %c0_13] : memref<1x2x8x128xf32, #tpu.memory_space<vmem>>, vector<1x1x8x128xf32>
    %23 = vector.shape_cast %22 : vector<1x1x8x128xf32> to vector<8x128xf32>
    %24 = arith.addf %23, %18 : vector<8x128xf32>
    %c0_14 = arith.constant 0 : index
    %c0_15 = arith.constant 0 : index
    %c0_16 = arith.constant 0 : index
    %c0_17 = arith.constant 0 : index
    %25 = vector.load %arg4[%c0_14, %c0_15, %c0_16, %c0_17] : memref<1x2x8x128xf32, #tpu.memory_space<vmem>>, vector<1x1x8x128xf32>
    %26 = vector.shape_cast %25 : vector<1x1x8x128xf32> to vector<8x128xf32>
    %27 = vector.shape_cast %24 : vector<8x128xf32> to vector<1x1x8x128xf32>
    tpu.vector_store %arg4[%c0_14, %c0_15, %c0_16, %c0_17], %27 {strides = array<i32>} : memref<1x2x8x128xf32, #tpu.memory_space<vmem>>, vector<1x1x8x128xf32>,
    %c0_18 = arith.constant 0 : index
    %c1 = arith.constant 1 : index
    %c0_19 = arith.constant 0 : index
    %c0_20 = arith.constant 0 : index
    %28 = vector.load %arg4[%c0_18, %c1, %c0_19, %c0_20] : memref<1x2x8x128xf32, #tpu.memory_space<vmem>>, vector<1x1x8x128xf32>
    %29 = vector.shape_cast %28 : vector<1x1x8x128xf32> to vector<8x128xf32>
    %30 = arith.addf %29, %21 : vector<8x128xf32>
    %c0_21 = arith.constant 0 : index
    %c1_22 = arith.constant 1 : index
    %c0_23 = arith.constant 0 : index
    %c0_24 = arith.constant 0 : index
    %31 = vector.load %arg4[%c0_21, %c1_22, %c0_23, %c0_24] : memref<1x2x8x128xf32, #tpu.memory_space<vmem>>, vector<1x1x8x128xf32>
    %32 = vector.shape_cast %31 : vector<1x1x8x128xf32> to vector<8x128xf32>
    %33 = vector.shape_cast %30 : vector<8x128xf32> to vector<1x1x8x128xf32>
    tpu.vector_store %arg4[%c0_21, %c1_22, %c0_23, %c0_24], %33 {strides = array<i32>} : memref<1x2x8x128xf32, #tpu.memory_space<vmem>>, vector<1x1x8x128xf32>,
    return
  }
  func.func @transform_0(%arg0: i32, %arg1: i32) -> (i32, i32) {
    %c1_i32 = arith.constant 1 : i32
    %0 = arith.muli %arg0, %c1_i32 : i32
    %1 = arith.addi %0, %arg1 : i32
    %c0_i32 = arith.constant 0 : i32
    %2 = arith.minsi %1, %c0_i32 : i32
    %c0_i32_0 = arith.constant 0 : i32
    %c0_i32_1 = arith.constant 0 : i32
    return %2, %c0_i32_0 : i32, i32
  }
  func.func @transform_1(%arg0: i32, %arg1: i32) -> (i32, i32) {
    %c1_i32 = arith.constant 1 : i32
    %0 = arith.muli %arg0, %c1_i32 : i32
    %1 = arith.addi %0, %arg1 : i32
    %c0_i32 = arith.constant 0 : i32
    %2 = arith.minsi %1, %c0_i32 : i32
    %c0_i32_0 = arith.constant 0 : i32
    %c0_i32_1 = arith.constant 0 : i32
    return %2, %c0_i32_0 : i32, i32
  }
  func.func @transform_2(%arg0: i32, %arg1: i32) -> (i32, i32, i32, i32) {
    %c0_i32 = arith.constant 0 : i32
    %c0_i32_0 = arith.constant 0 : i32
    %c0_i32_1 = arith.constant 0 : i32
    %c0_i32_2 = arith.constant 0 : i32
    return %arg0, %c0_i32, %c0_i32_0, %c0_i32_1 : i32, i32, i32, i32
  }
}

</mosaic_0001>

<llo_original>
// kernel: dice_loss.1
$region0: #{dice_loss.1}
  #allocation0 [shape = 'u32[]', space=smem, size = 0x4, offset = 0x4, fixed_abs, tag = 'smem constant byte address 0x4 - core index']
  #allocation1 [shape = 'u32[144,128]{1,0:T(1,128)}', space=vmem, size = 0x12000, scoped, tag = 'internal scratch']
  %s0 = inlined_call_operand.vmem [shape: f32[16,128], index: 0, kind: input, shape index: {}]
  %s1 = inlined_call_operand.vmem [shape: f32[16,128], index: 1, kind: input, shape index: {}]
  %s2 = inlined_call_operand.vmem [shape: f32[1,2,8,128], index: 2, kind: output, shape index: {}]
  %s3 = sld [smem:[#allocation0]]
  $region22: #{dice_loss.1} parent=0
    _
  %s5 = ssub.s32 1, %s3
  %s6 = scalar_select 0, %s5, %s3
  // Predicated region
  $region2: #{dice_loss.1} parent=0 // pred_check
    _
  $region3: #{dice_loss.1} parent=0 // pred_check_branch
    %8 = sbr.rel (0) target = $region5
  $region4: #{dice_loss.1} parent=0 // pred_region
    %s9 = sadd.s32 0, 0
    %p10 = scmp.lt.s32.totalorder %s9, 0
    %s11 = scalar_select %p10, %s9, 0
    %s12 = smul.u32 2, %s11
    %p13 = scmp.lt.s32.totalorder %s12, 1
    %s14 = scalar_select %p13, %s12, 1
    %s15 = smul.addr %s14, 8
    %s16 = scalar_lea.vmem %s0, %s15
    %s17 = sadd.s32 0, 0
    %p18 = scmp.lt.s32.totalorder %s17, 0
    %s19 = scalar_select %p18, %s17, 0
    %s20 = smul.u32 2, %s19
  $region5: #{dice_loss.1} parent=0 // pred_fallthru
    _
  // Predicated region
  $region6: #{dice_loss.1} parent=0 // pred_check
    _
  $region7: #{dice_loss.1} parent=0 // pred_check_branch
    %22 = sbr.rel (0) target = $region9
  $region8: #{dice_loss.1} parent=0 // pred_region
    %s23 = sadd.s32 0, 0
    %p24 = scmp.lt.s32.totalorder %s23, 0
    %s25 = scalar_select %p24, %s23, 0
    %s26 = smul.u32 2, %s25
    %p27 = scmp.lt.s32.totalorder %s26, 1
    %s28 = scalar_select %p27, %s26, 1
    %s29 = smul.addr %s28, 8
    %s30 = scalar_lea.vmem %s1, %s29
    %s31 = sadd.s32 0, 0
    %p32 = scmp.lt.s32.totalorder %s31, 0
    %s33 = scalar_select %p32, %s31, 0
    %s34 = smul.u32 2, %s33
  $region9: #{dice_loss.1} parent=0 // pred_fallthru
    _
  %s35 = sadd.s32 0, 0
  %p36 = scmp.lt.s32.totalorder %s35, 0
  %s37 = scalar_select %p36, %s35, 0
  %s38 = smul.u32 2, %s37
  %p39 = scmp.lt.s32.totalorder %s38, 1
  %s40 = scalar_select %p39, %s38, 1
  %s41 = smul.addr %s40, 8
  %s42 = scalar_lea.vmem %s0, %s41
  %s43 = sadd.s32 0, 0
  %p44 = scmp.lt.s32.totalorder %s43, 0
  %s45 = scalar_select %p44, %s43, 0
  %s46 = smul.u32 2, %s45
  %p47 = scmp.lt.s32.totalorder %s46, 1
  %s48 = scalar_select %p47, %s46, 1
  %s49 = smul.addr %s48, 8
  %s50 = scalar_lea.vmem %s1, %s49
  %s51 = sadd.s32 0, 0
  %p52 = scmp.lt.s32.totalorder %s51, 0
  %s53 = scalar_select %p52, %s51, 0
  %s54 = smul.u32 2, %s53
  %p55 = scmp.lt.s32.totalorder %s54, 1
  %s56 = scalar_select %p55, %s54, 1
  %s57 = smul.addr %s56, 8
  %s58 = scalar_lea.vmem %s0, %s57
  %s59 = sadd.s32 0, 0
  %p60 = scmp.lt.s32.totalorder %s59, 0
  %s61 = scalar_select %p60, %s59, 0
  %s62 = smul.u32 2, %s61
  %s63 = sadd.s32 0, 0
  %p64 = scmp.lt.s32.totalorder %s63, 0
  %s65 = scalar_select %p64, %s63, 0
  %s66 = smul.u32 2, %s65
  %p67 = scmp.lt.s32.totalorder %s66, 1
  %s68 = scalar_select %p67, %s66, 1
  %s69 = smul.addr %s68, 8
  %s70 = scalar_lea.vmem %s1, %s69
  %s71 = sadd.s32 0, 0
  %p72 = scmp.lt.s32.totalorder %s71, 0
  %s73 = scalar_select %p72, %s71, 0
  %s74 = smul.u32 2, %s73
  %p75 = scmp.eq.s32.totalorder 0, 0
  // Predicated region
  $region10: #{dice_loss.1} parent=0 // pred_check
    %p76 = pneg %p75
  $region11: #{dice_loss.1} parent=0 // pred_check_branch
    %78 = sbr.rel (%p76) target = $region13
  $region12: #{dice_loss.1} parent=0 // pred_region
    %79 = vst [vmem:[%s2] sm:$0xff] 0.0
    %80 = vst [vmem:[%s2 + $0x8] sm:$0xff] 0.0
  $region13: #{dice_loss.1} parent=0 // pred_fallthru
    _
  %v81 = vld [vmem:[%s58] sm:$0xff]
  %v82 = vld [vmem:[%s58 + $0x8] sm:$0xff]
  %v83 = vld [vmem:[%s70] sm:$0xff]
  %v84 = vld [vmem:[%s70 + $0x8] sm:$0xff]
  %v85 = vmul.f32 %v81, 0.5
  %v86 = vmul.f32 %v82, 0.5
  %v87 = vtanh.pop %v85
  %v88 = vtanh.pop %v86
  %v89 = vmul.f32 %v87, 0.5
  %v90 = vmul.f32 %v88, 0.5
  %v91 = vadd.f32 %v89, 0.5
  %v92 = vadd.f32 %v90, 0.5
  %v93 = vmul.f32 %v91, %v83
  %v94 = vmul.f32 %v92, %v84
  %v95 = vadd.f32 %v91, %v83
  %v96 = vadd.f32 %v92, %v84
  %v97 = vadd.f32 %v93, %v94
  %v98 = vadd.f32 %v97, 0.0
  %v99 = vadd.f32 %v95, %v96
  %v100 = vadd.f32 %v99, 0.0
  %v101 = vld [vmem:[%s2] sm:$0xff]
  %v102 = vadd.f32 %v101, %v98
  %103 = vst [vmem:[%s2] sm:$0xff] %v102
  %s104 = scalar_lea.vmem %s2, 8
  %v105 = vld [vmem:[%s104] sm:$0xff]
  %v106 = vadd.f32 %v105, %v100
  %107 = vst [vmem:[%s104] sm:$0xff] %v106
  // Predicated region
  $region14: #{dice_loss.1} parent=0 // pred_check
    _
  $region15: #{dice_loss.1} parent=0 // pred_check_branch
    %109 = sbr.rel (0) target = $region17
  $region16: #{dice_loss.1} parent=0 // pred_region
    _
  $region17: #{dice_loss.1} parent=0 // pred_fallthru
    _
  // Predicated region
  $region18: #{dice_loss.1} parent=0 // pred_check
    _
  $region19: #{dice_loss.1} parent=0 // pred_check_branch
    %111 = sbr.rel (0) target = $region21
  $region20: #{dice_loss.1} parent=0 // pred_region
    _
  $region21: #{dice_loss.1} parent=0 // pred_fallthru
    _

</llo_original>
